<compile_context>
chip_gen: v7x
topology: tpu7x:2x2x1
jax: 0.10.0
libtpu: 0.0.40
codegen_flags: <defaults>
</compile_context>

<pallas_src>
import jax
import jax.numpy as jnp
from jax import lax
from jax.experimental import pallas as pl
from jax.experimental.pallas import tpu as pltpu


def _retina_loss_kernel(hg_ref,                               # SMEM (N,) int32 (prefetch)
                        cls_ref, reg_ref, anch_ref, box_ref, gtr_ref,
                        out_ref,
                        f_acc, p_acc, r_acc, e_acc):
    f32 = jnp.float32
    i = pl.program_id(0)            # image
    j = pl.program_id(1)            # anchor tile
    nj = pl.num_programs(1)
    has_gt = hg_ref[i] > 0

    @pl.when(j == 0)
    def _init():
        zero = jnp.zeros((1, 1), f32)
        f_acc[...] = zero
        p_acc[...] = zero
        r_acc[...] = zero
        e_acc[...] = zero

    probs = cls_ref[0].astype(f32)                            # (C, TA)

    # ---------- image has GT: IoU -> assignment -> focal + smooth L1 ----------
    @pl.when(has_gt)
    def _with_gt():
        regp = reg_ref[0].astype(f32)                         # (4, TA)
        anch = anch_ref[...].astype(f32)                      # (12, TA)
        gtb = box_ref[0].astype(f32)                          # (M, 4)
        gtr = gtr_ref[0].astype(f32)                          # (8, M)

        ax1 = anch[0:1, :];  ay1 = anch[1:2, :]
        ax2 = anch[2:3, :];  ay2 = anch[3:4, :]
        acx = anch[4:5, :];  acy = anch[5:6, :]
        inv_w = anch[6:7, :]; inv_h = anch[7:8, :]
        log_w = anch[8:9, :]; log_h = anch[9:10, :]
        aarea = anch[10:11, :]

        bx1 = gtb[:, 0:1]; by1 = gtb[:, 1:2]
        bx2 = gtb[:, 2:3]; by2 = gtb[:, 3:4]                  # (M, 1)
        valid = bx1 != -1.0                                   # (M, 1)
        barea = (bx2 - bx1) * (by2 - by1)                     # (M, 1)

        # IoU: GT boxes on sublanes, anchors on lanes -> (M, TA), lane-dense
        iw = jnp.maximum(jnp.minimum(ax2, bx2) - jnp.maximum(ax1, bx1), 0.0)
        ih = jnp.maximum(jnp.minimum(ay2, by2) - jnp.maximum(ay1, by1), 0.0)
        inter = iw * ih
        union = jnp.maximum(aarea + barea - inter, 1e-8)
        iou = inter * pl.reciprocal(union, approx=True)
        iou = jnp.where(valid, iou, -1.0)                     # padded boxes never win

        M = iou.shape[0]
        iou_max = jnp.max(iou, axis=0, keepdims=True)                  # (1, TA)
        iota_m = lax.broadcasted_iota(jnp.int32, iou.shape, 0)         # (M, TA)
        first_ind = jnp.min(jnp.where(iou == iou_max, iota_m, M),
                            axis=0, keepdims=True)                     # first argmax
        onehot_box = (iota_m == first_ind).astype(f32)                 # (M, TA)

        # all 5 gathers (class id + 4 coords) in one small MXU matmul
        gathered = jnp.dot(gtr, onehot_box, preferred_element_type=f32)  # (8, TA)
        acls = gathered[0:1, :]
        gx1 = gathered[1:2, :]; gy1 = gathered[2:3, :]
        gx2 = gathered[3:4, :]; gy2 = gathered[4:5, :]

        pos = iou_max >= 0.5                                  # (1, TA)
        pos_f = pos.astype(f32)

        # ---- focal loss, classes on sublanes / anchors on lanes: (C, TA) ----
        p = jnp.clip(probs, 1e-4, 1.0 - 1e-4)
        row_iota = lax.broadcasted_iota(jnp.int32, probs.shape, 0)
        onehot_cls = row_iota == (acls.astype(jnp.int32) - 1)          # 1-indexed ids
        is_pos_cls = jnp.logical_and(pos, onehot_cls)                  # target == 1
        pt = jnp.where(is_pos_cls, p, 1.0 - p)
        bce = -jnp.log(pt)                                             # single log
        alpha = jnp.where(is_pos_cls, 0.25, 0.75)
        focal = alpha * (1.0 - pt) * (1.0 - pt) * bce
        ignore = jnp.logical_and(jnp.logical_not(pos), iou_max >= 0.4)  # target == -1
        focal = jnp.where(ignore, 0.0, focal)

        # ---- regression: encode against precomputed anchor constants ----
        gw = jnp.maximum(gx2 - gx1, 1.0)
        gh = jnp.maximum(gy2 - gy1, 1.0)
        gcx = gx1 + 0.5 * (gx2 - gx1)
        gcy = gy1 + 0.5 * (gy2 - gy1)
        t_dx = (gcx - acx) * inv_w * 10.0                     # == (gcx-cx)/w/0.1
        t_dy = (gcy - acy) * inv_h * 10.0
        t_dw = (jnp.log(gw) - log_w) * 5.0                    # == log(gw/w)/0.2
        t_dh = (jnp.log(gh) - log_h) * 5.0

        def sl1_sum(t, k):
            diff = jnp.abs(t - regp[k:k + 1, :])
            l = jnp.where(diff <= 1.0 / 9.0, 4.5 * diff * diff, diff - 0.5 / 9.0)
            return jnp.sum(l * pos_f)

        reg_sum = (sl1_sum(t_dx, 0) + sl1_sum(t_dy, 1) +
                   sl1_sum(t_dw, 2) + sl1_sum(t_dh, 3))

        f_acc[...] += jnp.full((1, 1), jnp.sum(focal), f32)
        p_acc[...] += jnp.full((1, 1), jnp.sum(pos_f), f32)
        r_acc[...] += jnp.full((1, 1), reg_sum, f32)

    # ---------- image has no GT: all-background focal term (gated) ----------
    @pl.when(jnp.logical_not(has_gt))
    def _no_gt():
        e = 0.75 * probs * probs * (-jnp.log(1.0 - probs))
        e_acc[...] += jnp.full((1, 1), jnp.sum(e), f32)

    # ---------- finalize on the last anchor tile (single merged store) ----------
    last = j == nj - 1
    lane = lax.broadcasted_iota(jnp.int32, (1, 2), 1)

    @pl.when(jnp.logical_and(last, has_gt))
    def _finalize_gt():
        np_raw = p_acc[...]                                   # (1, 1)
        np_clamped = jnp.maximum(np_raw, 1.0)
        cls_v = f_acc[...] / np_clamped
        reg_v = jnp.where(np_raw > 0.0, r_acc[...] / (np_clamped * 4.0), 0.0)
        out_ref[0] = jnp.where(lane == 0,
                               jnp.broadcast_to(cls_v, (1, 2)),
                               jnp.broadcast_to(reg_v, (1, 2)))

    @pl.when(jnp.logical_and(last, jnp.logical_not(has_gt)))
    def _finalize_empty():
        out_ref[0] = jnp.where(lane == 0,
                               jnp.broadcast_to(e_acc[...], (1, 2)),
                               jnp.zeros((1, 2), jnp.float32))


def retina_loss(cls_probs, reg_preds, anchors, boxes, classes, *, anchor_tile=None):
    """cls_probs (N,A,C) sigmoid probs, reg_preds (N,A,4), anchors (A,4),
    boxes (N,M,4) with -1 padding, classes (N,M) 1-indexed ids.
    cls_probs / reg_preds may be bf16 to halve HBM->VMEM traffic (cast to f32
    in-kernel); no forced f32 upcast is done here."""
    N, A, C = cls_probs.shape
    M = boxes.shape[1]
    f32 = jnp.float32

    # Anchor-major -> lane-major (A on the last/lane axis); done once here.
    cls_t = jnp.transpose(cls_probs, (0, 2, 1))               # (N, C, A)
    reg_t = jnp.transpose(reg_preds, (0, 2, 1))               # (N, 4, A)

    # Precompute per-anchor constants once (centers, reciprocals, logs, area).
    anch = anchors.astype(f32)
    ax1, ay1, ax2, ay2 = anch[:, 0], anch[:, 1], anch[:, 2], anch[:, 3]
    aw = ax2 - ax1
    ah = ay2 - ay1
    anch_feat = jnp.stack([
        ax1, ay1, ax2, ay2,
        ax1 + 0.5 * aw, ay1 + 0.5 * ah,
        1.0 / aw, 1.0 / ah,
        jnp.log(aw), jnp.log(ah),
        aw * ah, jnp.zeros_like(aw),
    ], axis=0)                                                # (12, A)

    boxes_f = boxes.astype(f32)                               # (N, M, 4)
    gt_rows = jnp.concatenate(
        [classes.astype(f32)[:, None, :],                     # class id
         jnp.transpose(boxes_f, (0, 2, 1)),                   # x1, y1, x2, y2
         jnp.zeros((N, 3, M), f32)], axis=1)                  # (N, 8, M)
    has_gt = jnp.sum((boxes_f[:, :, 0] != -1.0).astype(jnp.int32), axis=1)  # (N,)

    # Anchor-tile size: lane-aligned tiles keep the per-step VMEM footprint
    # bounded at production sizes (A ~ 100-200k) on v7x/v6e/v5e.
    if anchor_tile is None:
        anchor_tile = A if A <= 8192 else 8192
    TA = anchor_tile
    # TODO(synk): pad A to a multiple of the tile (with -inf IoU anchors) when
    # A is not divisible by the chosen anchor tile.
    assert TA == A or (A % TA == 0 and TA % 128 == 0), "bad anchor tile"

    grid_spec = pltpu.PrefetchScalarGridSpec(
        num_scalar_prefetch=1,
        grid=(N, A // TA),
        in_specs=[
            pl.BlockSpec((1, C, TA), lambda i, j, hg: (i, 0, j)),   # cls probs
            pl.BlockSpec((1, 4, TA), lambda i, j, hg: (i, 0, j)),   # reg preds
            pl.BlockSpec((12, TA), lambda i, j, hg: (0, j)),        # anchor feats
            pl.BlockSpec((1, M, 4), lambda i, j, hg: (i, 0, 0)),    # GT boxes (cols)
            pl.BlockSpec((1, 8, M), lambda i, j, hg: (i, 0, 0)),    # GT feats (rows)
        ],
        out_specs=pl.BlockSpec((1, 1, 2), lambda i, j, hg: (i, 0, 0)),
        scratch_shapes=[pltpu.VMEM((1, 1), jnp.float32)] * 4,       # focal/npos/reg/empty
    )
    out = pl.pallas_call(
        _retina_loss_kernel,
        out_shape=jax.ShapeDtypeStruct((N, 1, 2), jnp.float32),
        grid_spec=grid_spec,
        compiler_params=pltpu.CompilerParams(
            dimension_semantics=("parallel", "arbitrary")),
    )(has_gt, cls_t, reg_t, anch_feat, boxes_f, gt_rows)

    cls_loss = jnp.mean(out[:, 0, 0])
    reg_loss = jnp.mean(out[:, 0, 1])
    return cls_loss, reg_loss, cls_loss + reg_loss


if __name__ == "__main__":
    key = jax.random.PRNGKey(0)
    N, A, C, M = 3, 128, 8, 8
    k1, k2 = jax.random.split(key)

    # head outputs: sigmoid probabilities for cls, small deltas for reg
    cls_probs = jax.nn.sigmoid(jax.random.normal(k1, (N, A, C), jnp.float32))
    reg_preds = 0.1 * jax.random.normal(k2, (N, A, 4), jnp.float32)

    # anchors on a 16x8 grid, 12x12 boxes
    gx = (jnp.arange(A) % 16).astype(jnp.float32) * 10.0
    gy = (jnp.arange(A) // 16).astype(jnp.float32) * 10.0
    anchors = jnp.stack([gx, gy, gx + 12.0, gy + 12.0], axis=1)

    # GT boxes: padding marked with -1 (padding at the end, as the PyTorch code assumes)
    # image 2 intentionally has NO GT boxes to exercise the empty-GT branch.
    boxes = -jnp.ones((N, M, 4), jnp.float32)
    classes = jnp.zeros((N, M), jnp.float32)
    gt_spec = ((0, (5, 20, 77), (3, 1, 5)),      # image 0: 3 GT boxes
               (1, (40, 100), (2, 7)))           # image 1: 2 GT boxes
    shift = jnp.array([1.0, -1.0, 1.0, -1.0], jnp.float32)
    for b, idxs, cls_ids in gt_spec:
        for j, (ai, ci) in enumerate(zip(idxs, cls_ids)):
            boxes = boxes.at[b, j].set(anchors[ai] + shift)   # IoU ~0.72 -> positive
            classes = classes.at[b, j].set(float(ci))         # 1-indexed class id

    out = jax.jit(retina_loss)(cls_probs, reg_preds, anchors, boxes, classes)
    out = jax.block_until_ready(out)
    cls_l, reg_l, tot = out
    assert bool(jnp.isfinite(cls_l)) and bool(jnp.isfinite(reg_l)) and bool(jnp.isfinite(tot))
    print("KERNEL_OK")
</pallas_src>

<mosaic_0001>
module attributes {stable_mosaic.version = 11 : i64} {
  func.func @_retina_loss_kernel(%arg0: i32, %arg1: i32, %arg2: memref<3xi32, #tpu.memory_space<smem>>, %arg3: memref<1x8x128xf32, #tpu.memory_space<vmem>>, %arg4: memref<1x4x128xf32, #tpu.memory_space<vmem>>, %arg5: memref<12x128xf32, #tpu.memory_space<vmem>>, %arg6: memref<1x8x4xf32, #tpu.memory_space<vmem>>, %arg7: memref<1x8x8xf32, #tpu.memory_space<vmem>>, %arg8: memref<1x1x2xf32, #tpu.memory_space<vmem>>, %arg9: memref<1x1xf32, #tpu.memory_space<vmem>>, %arg10: memref<1x1xf32, #tpu.memory_space<vmem>>, %arg11: memref<1x1xf32, #tpu.memory_space<vmem>>, %arg12: memref<1x1xf32, #tpu.memory_space<vmem>>) attributes {dimension_semantics = [#tpu.dimension_semantics<parallel>, #tpu.dimension_semantics<arbitrary>], iteration_bounds = array<i64: 3, 1>, scalar_prefetch = 1 : i64, scratch_operands = 4 : i64, tpu.core_type = #tpu.core_type<tc>, window_params = [{transform_indices = @transform_0, window_bounds = array<i64: 1, 8, 128>}, {transform_indices = @transform_1, window_bounds = array<i64: 1, 4, 128>}, {transform_indices = @transform_2, window_bounds = array<i64: 12, 128>}, {transform_indices = @transform_3, window_bounds = array<i64: 1, 8, 4>}, {transform_indices = @transform_4, window_bounds = array<i64: 1, 8, 8>}, {transform_indices = @transform_5, window_bounds = array<i64: 1, 1, 2>}]} {
    %0 = arith.index_cast %arg0 : i32 to index
    %1 = memref.load %arg2[%0] : memref<3xi32, #tpu.memory_space<smem>>
    %c0_i32 = arith.constant 0 : i32
    %2 = arith.cmpi sgt, %1, %c0_i32 : i32
    %c0_i32_0 = arith.constant 0 : i32
    %3 = arith.cmpi eq, %arg1, %c0_i32_0 : i32
    %4 = arith.extui %3 : i1 to i32
    %c0_i32_1 = arith.constant 0 : i32
    %5 = arith.cmpi ne, %4, %c0_i32_1 : i32
    scf.if %5 {
      %cst = arith.constant 0.000000e+00 : f32
      %22 = vector.broadcast %cst : f32 to vector<1x1xf32>
      %c0_10 = arith.constant 0 : index
      %c0_11 = arith.constant 0 : index
      %23 = vector.load %arg9[%c0_10, %c0_11] : memref<1x1xf32, #tpu.memory_space<vmem>>, vector<1x1xf32>
      tpu.vector_store %arg9[%c0_10, %c0_11], %22 {strides = array<i32>} : memref<1x1xf32, #tpu.memory_space<vmem>>, vector<1x1xf32>,
      %c0_12 = arith.constant 0 : index
      %c0_13 = arith.constant 0 : index
      %24 = vector.load %arg10[%c0_12, %c0_13] : memref<1x1xf32, #tpu.memory_space<vmem>>, vector<1x1xf32>
      tpu.vector_store %arg10[%c0_12, %c0_13], %22 {strides = array<i32>} : memref<1x1xf32, #tpu.memory_space<vmem>>, vector<1x1xf32>,
      %c0_14 = arith.constant 0 : index
      %c0_15 = arith.constant 0 : index
      %25 = vector.load %arg11[%c0_14, %c0_15] : memref<1x1xf32, #tpu.memory_space<vmem>>, vector<1x1xf32>
      tpu.vector_store %arg11[%c0_14, %c0_15], %22 {strides = array<i32>} : memref<1x1xf32, #tpu.memory_space<vmem>>, vector<1x1xf32>,
      %c0_16 = arith.constant 0 : index
      %c0_17 = arith.constant 0 : index
      %26 = vector.load %arg12[%c0_16, %c0_17] : memref<1x1xf32, #tpu.memory_space<vmem>>, vector<1x1xf32>
      tpu.vector_store %arg12[%c0_16, %c0_17], %22 {strides = array<i32>} : memref<1x1xf32, #tpu.memory_space<vmem>>, vector<1x1xf32>,
    } else {
    }
    %c0 = arith.constant 0 : index
    %c0_2 = arith.constant 0 : index
    %c0_3 = arith.constant 0 : index
    %6 = vector.load %arg3[%c0, %c0_2, %c0_3] : memref<1x8x128xf32, #tpu.memory_space<vmem>>, vector<1x8x128xf32>
    %7 = vector.shape_cast %6 : vector<1x8x128xf32> to vector<8x128xf32>
    %8 = arith.extui %2 : i1 to i32
    %c0_i32_4 = arith.constant 0 : i32
    %9 = arith.cmpi ne, %8, %c0_i32_4 : i32
    scf.if %9 {
      %c0_10 = arith.constant 0 : index
      %c0_11 = arith.constant 0 : index
      %c0_12 = arith.constant 0 : index
      %22 = vector.load %arg4[%c0_10, %c0_11, %c0_12] : memref<1x4x128xf32, #tpu.memory_space<vmem>>, vector<1x4x128xf32>
      %23 = vector.shape_cast %22 : vector<1x4x128xf32> to vector<4x128xf32>
      %c0_13 = arith.constant 0 : index
      %c0_14 = arith.constant 0 : index
      %24 = vector.load %arg5[%c0_13, %c0_14] : memref<12x128xf32, #tpu.memory_space<vmem>>, vector<12x128xf32>
      %c0_15 = arith.constant 0 : index
      %c0_16 = arith.constant 0 : index
      %c0_17 = arith.constant 0 : index
      %25 = vector.load %arg6[%c0_15, %c0_16, %c0_17] : memref<1x8x4xf32, #tpu.memory_space<vmem>>, vector<1x8x4xf32>
      %26 = vector.shape_cast %25 : vector<1x8x4xf32> to vector<8x4xf32>
      %c0_18 = arith.constant 0 : index
      %c0_19 = arith.constant 0 : index
      %c0_20 = arith.constant 0 : index
      %27 = vector.load %arg7[%c0_18, %c0_19, %c0_20] : memref<1x8x8xf32, #tpu.memory_space<vmem>>, vector<1x8x8xf32>
      %28 = vector.shape_cast %27 : vector<1x8x8xf32> to vector<8x8xf32>
      %29 = vector.extract_strided_slice %24 {offsets = [0, 0], sizes = [1, 128], strides = [1, 1]} : vector<12x128xf32> to vector<1x128xf32>
      %30 = vector.extract_strided_slice %24 {offsets = [1, 0], sizes = [1, 128], strides = [1, 1]} : vector<12x128xf32> to vector<1x128xf32>
      %31 = vector.extract_strided_slice %24 {offsets = [2, 0], sizes = [1, 128], strides = [1, 1]} : vector<12x128xf32> to vector<1x128xf32>
      %32 = vector.extract_strided_slice %24 {offsets = [3, 0], sizes = [1, 128], strides = [1, 1]} : vector<12x128xf32> to vector<1x128xf32>
      %33 = vector.extract_strided_slice %24 {offsets = [4, 0], sizes = [1, 128], strides = [1, 1]} : vector<12x128xf32> to vector<1x128xf32>
      %34 = vector.extract_strided_slice %24 {offsets = [5, 0], sizes = [1, 128], strides = [1, 1]} : vector<12x128xf32> to vector<1x128xf32>
      %35 = vector.extract_strided_slice %24 {offsets = [6, 0], sizes = [1, 128], strides = [1, 1]} : vector<12x128xf32> to vector<1x128xf32>
      %36 = vector.extract_strided_slice %24 {offsets = [7, 0], sizes = [1, 128], strides = [1, 1]} : vector<12x128xf32> to vector<1x128xf32>
      %37 = vector.extract_strided_slice %24 {offsets = [8, 0], sizes = [1, 128], strides = [1, 1]} : vector<12x128xf32> to vector<1x128xf32>
      %38 = vector.extract_strided_slice %24 {offsets = [9, 0], sizes = [1, 128], strides = [1, 1]} : vector<12x128xf32> to vector<1x128xf32>
      %39 = vector.extract_strided_slice %24 {offsets = [10, 0], sizes = [1, 128], strides = [1, 1]} : vector<12x128xf32> to vector<1x128xf32>
      %40 = vector.extract_strided_slice %26 {offsets = [0, 0], sizes = [8, 1], strides = [1, 1]} : vector<8x4xf32> to vector<8x1xf32>
      %41 = vector.extract_strided_slice %26 {offsets = [0, 1], sizes = [8, 1], strides = [1, 1]} : vector<8x4xf32> to vector<8x1xf32>
      %42 = vector.extract_strided_slice %26 {offsets = [0, 2], sizes = [8, 1], strides = [1, 1]} : vector<8x4xf32> to vector<8x1xf32>
      %43 = vector.extract_strided_slice %26 {offsets = [0, 3], sizes = [8, 1], strides = [1, 1]} : vector<8x4xf32> to vector<8x1xf32>
      %cst = arith.constant -1.000000e+00 : f32
      %44 = vector.broadcast %cst : f32 to vector<8x1xf32>
      %45 = arith.cmpf one, %40, %44 : vector<8x1xf32>
      %46 = arith.subf %42, %40 : vector<8x1xf32>
      %47 = arith.subf %43, %41 : vector<8x1xf32>
      %48 = arith.mulf %46, %47 : vector<8x1xf32>
      %49 = vector.broadcast %31 : vector<1x128xf32> to vector<8x128xf32>
      %50 = vector.broadcast %42 : vector<8x1xf32> to vector<8x128xf32>
      %51 = arith.minimumf %49, %50 : vector<8x128xf32>
      %52 = vector.broadcast %29 : vector<1x128xf32> to vector<8x128xf32>
      %53 = vector.broadcast %40 : vector<8x1xf32> to vector<8x128xf32>
      %54 = arith.maximumf %52, %53 : vector<8x128xf32>
      %55 = arith.subf %51, %54 : vector<8x128xf32>
      %cst_21 = arith.constant 0.000000e+00 : f32
      %56 = vector.broadcast %cst_21 : f32 to vector<8x128xf32>
      %57 = arith.maximumf %55, %56 : vector<8x128xf32>
      %58 = vector.broadcast %32 : vector<1x128xf32> to vector<8x128xf32>
      %59 = vector.broadcast %43 : vector<8x1xf32> to vector<8x128xf32>
      %60 = arith.minimumf %58, %59 : vector<8x128xf32>
      %61 = vector.broadcast %30 : vector<1x128xf32> to vector<8x128xf32>
      %62 = vector.broadcast %41 : vector<8x1xf32> to vector<8x128xf32>
      %63 = arith.maximumf %61, %62 : vector<8x128xf32>
      %64 = arith.subf %60, %63 : vector<8x128xf32>
      %cst_22 = arith.constant 0.000000e+00 : f32
      %65 = vector.broadcast %cst_22 : f32 to vector<8x128xf32>
      %66 = arith.maximumf %64, %65 : vector<8x128xf32>
      %67 = arith.mulf %57, %66 : vector<8x128xf32>
      %68 = vector.broadcast %39 : vector<1x128xf32> to vector<8x128xf32>
      %69 = vector.broadcast %48 : vector<8x1xf32> to vector<8x128xf32>
      %70 = arith.addf %68, %69 : vector<8x128xf32>
      %71 = arith.subf %70, %67 : vector<8x128xf32>
      %cst_23 = arith.constant 9.99999993E-9 : f32
      %72 = vector.broadcast %cst_23 : f32 to vector<8x128xf32>
      %73 = arith.maximumf %71, %72 : vector<8x128xf32>
      %74 = tpu.reciprocal %73 {approx = true} : vector<8x128xf32> -> vector<8x128xf32>
      %75 = arith.mulf %67, %74 : vector<8x128xf32>
      %cst_24 = arith.constant -1.000000e+00 : f32
      %76 = vector.shape_cast %45 : vector<8x1xi1> to vector<8x1xi1>
      %77 = vector.broadcast %76 : vector<8x1xi1> to vector<8x128xi1>
      %78 = vector.broadcast %cst_24 : f32 to vector<8x128xf32>
      %79 = arith.select %77, %75, %78 : vector<8x128xi1>, vector<8x128xf32>
      %cst_25 = arith.constant dense<0xFF800000> : vector<128xf32>
      %80 = vector.multi_reduction <maximumf>, %79, %cst_25 [0] : vector<8x128xf32> to vector<128xf32>
      %81 = vector.shape_cast %80 : vector<128xf32> to vector<1x128xf32>
      %82 = tpu.iota {dimensions = array<i32: 0>} : vector<8x128xi32>
      %83 = vector.broadcast %81 : vector<1x128xf32> to vector<8x128xf32>
      %84 = arith.cmpf oeq, %79, %83 : vector<8x128xf32>
      %c8_i32 = arith.constant 8 : i32
      %85 = vector.broadcast %c8_i32 : i32 to vector<8x128xi32>
      %86 = arith.select %84, %82, %85 : vector<8x128xi1>, vector<8x128xi32>
      %cst_26 = arith.constant dense<2147483647> : vector<128xi32>
      %87 = vector.multi_reduction <minsi>, %86, %cst_26 [0] : vector<8x128xi32> to vector<128xi32>
      %88 = vector.shape_cast %87 : vector<128xi32> to vector<1x128xi32>
      %89 = vector.broadcast %88 : vector<1x128xi32> to vector<8x128xi32>
      %90 = arith.cmpi eq, %82, %89 : vector<8x128xi32>
      %91 = arith.extui %90 : vector<8x128xi1> to vector<8x128xi32>
      %92 = arith.sitofp %91 : vector<8x128xi32> to vector<8x128xf32>
      %cst_27 = arith.constant dense<0.000000e+00> : vector<8x128xf32>
      %93 = tpu.matmul %28, %92, %cst_27 {dimension_numbers = #tpu.dot_dimension_numbers<[1], [0], [0], [1], [0, 0, 1, 1], [], []>} : vector<8x8xf32>, vector<8x128xf32>, vector<8x128xf32> -> vector<8x128xf32>
      %94 = vector.extract_strided_slice %93 {offsets = [0, 0], sizes = [1, 128], strides = [1, 1]} : vector<8x128xf32> to vector<1x128xf32>
      %95 = vector.extract_strided_slice %93 {offsets = [1, 0], sizes = [1, 128], strides = [1, 1]} : vector<8x128xf32> to vector<1x128xf32>
      %96 = vector.extract_strided_slice %93 {offsets = [2, 0], sizes = [1, 128], strides = [1, 1]} : vector<8x128xf32> to vector<1x128xf32>
      %97 = vector.extract_strided_slice %93 {offsets = [3, 0], sizes = [1, 128], strides = [1, 1]} : vector<8x128xf32> to vector<1x128xf32>
      %98 = vector.extract_strided_slice %93 {offsets = [4, 0], sizes = [1, 128], strides = [1, 1]} : vector<8x128xf32> to vector<1x128xf32>
      %cst_28 = arith.constant 5.000000e-01 : f32
      %99 = vector.broadcast %cst_28 : f32 to vector<1x128xf32>
      %100 = arith.cmpf oge, %81, %99 : vector<1x128xf32>
      %101 = arith.extui %100 : vector<1x128xi1> to vector<1x128xi32>
      %102 = arith.sitofp %101 : vector<1x128xi32> to vector<1x128xf32>
      %cst_29 = arith.constant 9.99999974E-5 : f32
      %cst_30 = arith.constant 0.999899983 : f32
      %103 = vector.broadcast %cst_29 : f32 to vector<8x128xf32>
      %104 = arith.maximumf %103, %7 : vector<8x128xf32>
      %105 = vector.broadcast %cst_30 : f32 to vector<8x128xf32>
      %106 = arith.minimumf %105, %104 : vector<8x128xf32>
      %107 = tpu.iota {dimensions = array<i32: 0>} : vector<8x128xi32>
      %108 = arith.fptosi %94 : vector<1x128xf32> to vector<1x128xi32>
      %c1_i32 = arith.constant 1 : i32
      %109 = vector.broadcast %c1_i32 : i32 to vector<1x128xi32>
      %110 = arith.subi %108, %109 : vector<1x128xi32>
      %111 = vector.broadcast %110 : vector<1x128xi32> to vector<8x128xi32>
      %112 = arith.cmpi eq, %107, %111 : vector<8x128xi32>
      %113 = vector.broadcast %100 : vector<1x128xi1> to vector<8x128xi1>
      %114 = arith.andi %113, %112 : vector<8x128xi1>
      %cst_31 = arith.constant 1.000000e+00 : f32
      %115 = vector.broadcast %cst_31 : f32 to vector<8x128xf32>
      %116 = arith.subf %115, %106 : vector<8x128xf32>
      %117 = arith.select %114, %106, %116 : vector<8x128xi1>, vector<8x128xf32>
      %118 = math.log %117 : vector<8x128xf32>
      %cst_32 = arith.constant 0.000000e+00 : f32
      %119 = vector.broadcast %cst_32 : f32 to vector<8x128xf32>
      %120 = arith.subf %119, %118 : vector<8x128xf32>
      %cst_33 = arith.constant 2.500000e-01 : f32
      %cst_34 = arith.constant 7.500000e-01 : f32
      %121 = vector.broadcast %cst_33 : f32 to vector<8x128xf32>
      %122 = vector.broadcast %cst_34 : f32 to vector<8x128xf32>
      %123 = arith.select %114, %121, %122 : vector<8x128xi1>, vector<8x128xf32>
      %cst_35 = arith.constant 1.000000e+00 : f32
      %124 = vector.broadcast %cst_35 : f32 to vector<8x128xf32>
      %125 = arith.subf %124, %117 : vector<8x128xf32>
      %126 = arith.mulf %123, %125 : vector<8x128xf32>
      %cst_36 = arith.constant 1.000000e+00 : f32
      %127 = vector.broadcast %cst_36 : f32 to vector<8x128xf32>
      %128 = arith.subf %127, %117 : vector<8x128xf32>
      %129 = arith.mulf %126, %128 : vector<8x128xf32>
      %130 = arith.mulf %129, %120 : vector<8x128xf32>
      %cst_37 = arith.constant dense<true> : vector<1x128xi1>
      %131 = arith.xori %100, %cst_37 : vector<1x128xi1>
      %cst_38 = arith.constant 4.000000e-01 : f32
      %132 = vector.broadcast %cst_38 : f32 to vector<1x128xf32>
      %133 = arith.cmpf oge, %81, %132 : vector<1x128xf32>
      %134 = arith.andi %131, %133 : vector<1x128xi1>
      %cst_39 = arith.constant 0.000000e+00 : f32
      %135 = vector.shape_cast %134 : vector<1x128xi1> to vector<1x128xi1>
      %136 = vector.broadcast %135 : vector<1x128xi1> to vector<8x128xi1>
      %137 = vector.broadcast %cst_39 : f32 to vector<8x128xf32>
      %138 = arith.select %136, %137, %130 : vector<8x128xi1>, vector<8x128xf32>
      %139 = arith.subf %97, %95 : vector<1x128xf32>
      %cst_40 = arith.constant 1.000000e+00 : f32
      %140 = vector.broadcast %cst_40 : f32 to vector<1x128xf32>
      %141 = arith.maximumf %139, %140 : vector<1x128xf32>
      %142 = arith.subf %98, %96 : vector<1x128xf32>
      %cst_41 = arith.constant 1.000000e+00 : f32
      %143 = vector.broadcast %cst_41 : f32 to vector<1x128xf32>
      %144 = arith.maximumf %142, %143 : vector<1x128xf32>
      %145 = arith.subf %97, %95 : vector<1x128xf32>
      %cst_42 = arith.constant 5.000000e-01 : f32
      %146 = vector.broadcast %cst_42 : f32 to vector<1x128xf32>
      %147 = arith.mulf %146, %145 : vector<1x128xf32>
      %148 = arith.addf %95, %147 : vector<1x128xf32>
      %149 = arith.subf %98, %96 : vector<1x128xf32>
      %cst_43 = arith.constant 5.000000e-01 : f32
      %150 = vector.broadcast %cst_43 : f32 to vector<1x128xf32>
      %151 = arith.mulf %150, %149 : vector<1x128xf32>
      %152 = arith.addf %96, %151 : vector<1x128xf32>
      %153 = arith.subf %148, %33 : vector<1x128xf32>
      %154 = arith.mulf %153, %35 : vector<1x128xf32>
      %cst_44 = arith.constant 1.000000e+01 : f32
      %155 = vector.broadcast %cst_44 : f32 to vector<1x128xf32>
      %156 = arith.mulf %154, %155 : vector<1x128xf32>
      %157 = arith.subf %152, %34 : vector<1x128xf32>
      %158 = arith.mulf %157, %36 : vector<1x128xf32>
      %cst_45 = arith.constant 1.000000e+01 : f32
      %159 = vector.broadcast %cst_45 : f32 to vector<1x128xf32>
      %160 = arith.mulf %158, %159 : vector<1x128xf32>
      %161 = math.log %141 : vector<1x128xf32>
      %162 = arith.subf %161, %37 : vector<1x128xf32>
      %cst_46 = arith.constant 5.000000e+00 : f32
      %163 = vector.broadcast %cst_46 : f32 to vector<1x128xf32>
      %164 = arith.mulf %162, %163 : vector<1x128xf32>
      %165 = math.log %144 : vector<1x128xf32>
      %166 = arith.subf %165, %38 : vector<1x128xf32>
      %cst_47 = arith.constant 5.000000e+00 : f32
      %167 = vector.broadcast %cst_47 : f32 to vector<1x128xf32>
      %168 = arith.mulf %166, %167 : vector<1x128xf32>
      %169 = vector.extract_strided_slice %23 {offsets = [0, 0], sizes = [1, 128], strides = [1, 1]} : vector<4x128xf32> to vector<1x128xf32>
      %170 = arith.subf %156, %169 : vector<1x128xf32>
      %171 = math.absf %170 : vector<1x128xf32>
      %cst_48 = arith.constant 0.111111112 : f32
      %172 = vector.broadcast %cst_48 : f32 to vector<1x128xf32>
      %173 = arith.cmpf ole, %171, %172 : vector<1x128xf32>
      %cst_49 = arith.constant 4.500000e+00 : f32
      %174 = vector.broadcast %cst_49 : f32 to vector<1x128xf32>
      %175 = arith.mulf %174, %171 : vector<1x128xf32>
      %176 = arith.mulf %175, %171 : vector<1x128xf32>
      %cst_50 = arith.constant 0.055555556 : f32
      %177 = vector.broadcast %cst_50 : f32 to vector<1x128xf32>
      %178 = arith.subf %171, %177 : vector<1x128xf32>
      %179 = arith.select %173, %176, %178 : vector<1x128xi1>, vector<1x128xf32>
      %180 = arith.mulf %179, %102 : vector<1x128xf32>
      %181 = vector.shape_cast %180 : vector<1x128xf32> to vector<1x1x128xf32>
      %cst_51 = arith.constant dense<0.000000e+00> : vector<1xf32>
      %182 = vector.multi_reduction <add>, %181, %cst_51 [1, 2] : vector<1x1x128xf32> to vector<1xf32>
      %183 = vector.shape_cast %182 : vector<1xf32> to vector<1x1x1xf32>
      %184 = vector.extract %183[0, 0, 0] : f32 from vector<1x1x1xf32>
      %185 = vector.extract_strided_slice %23 {offsets = [1, 0], sizes = [1, 128], strides = [1, 1]} : vector<4x128xf32> to vector<1x128xf32>
      %186 = arith.subf %160, %185 : vector<1x128xf32>
      %187 = math.absf %186 : vector<1x128xf32>
      %cst_52 = arith.constant 0.111111112 : f32
      %188 = vector.broadcast %cst_52 : f32 to vector<1x128xf32>
      %189 = arith.cmpf ole, %187, %188 : vector<1x128xf32>
      %cst_53 = arith.constant 4.500000e+00 : f32
      %190 = vector.broadcast %cst_53 : f32 to vector<1x128xf32>
      %191 = arith.mulf %190, %187 : vector<1x128xf32>
      %192 = arith.mulf %191, %187 : vector<1x128xf32>
      %cst_54 = arith.constant 0.055555556 : f32
      %193 = vector.broadcast %cst_54 : f32 to vector<1x128xf32>
      %194 = arith.subf %187, %193 : vector<1x128xf32>
      %195 = arith.select %189, %192, %194 : vector<1x128xi1>, vector<1x128xf32>
      %196 = arith.mulf %195, %102 : vector<1x128xf32>
      %197 = vector.shape_cast %196 : vector<1x128xf32> to vector<1x1x128xf32>
      %cst_55 = arith.constant dense<0.000000e+00> : vector<1xf32>
      %198 = vector.multi_reduction <add>, %197, %cst_55 [1, 2] : vector<1x1x128xf32> to vector<1xf32>
      %199 = vector.shape_cast %198 : vector<1xf32> to vector<1x1x1xf32>
      %200 = vector.extract %199[0, 0, 0] : f32 from vector<1x1x1xf32>
      %201 = arith.addf %184, %200 : f32
      %202 = vector.extract_strided_slice %23 {offsets = [2, 0], sizes = [1, 128], strides = [1, 1]} : vector<4x128xf32> to vector<1x128xf32>
      %203 = arith.subf %164, %202 : vector<1x128xf32>
      %204 = math.absf %203 : vector<1x128xf32>
      %cst_56 = arith.constant 0.111111112 : f32
      %205 = vector.broadcast %cst_56 : f32 to vector<1x128xf32>
      %206 = arith.cmpf ole, %204, %205 : vector<1x128xf32>
      %cst_57 = arith.constant 4.500000e+00 : f32
      %207 = vector.broadcast %cst_57 : f32 to vector<1x128xf32>
      %208 = arith.mulf %207, %204 : vector<1x128xf32>
      %209 = arith.mulf %208, %204 : vector<1x128xf32>
      %cst_58 = arith.constant 0.055555556 : f32
      %210 = vector.broadcast %cst_58 : f32 to vector<1x128xf32>
      %211 = arith.subf %204, %210 : vector<1x128xf32>
      %212 = arith.select %206, %209, %211 : vector<1x128xi1>, vector<1x128xf32>
      %213 = arith.mulf %212, %102 : vector<1x128xf32>
      %214 = vector.shape_cast %213 : vector<1x128xf32> to vector<1x1x128xf32>
      %cst_59 = arith.constant dense<0.000000e+00> : vector<1xf32>
      %215 = vector.multi_reduction <add>, %214, %cst_59 [1, 2] : vector<1x1x128xf32> to vector<1xf32>
      %216 = vector.shape_cast %215 : vector<1xf32> to vector<1x1x1xf32>
      %217 = vector.extract %216[0, 0, 0] : f32 from vector<1x1x1xf32>
      %218 = arith.addf %201, %217 : f32
      %219 = vector.extract_strided_slice %23 {offsets = [3, 0], sizes = [1, 128], strides = [1, 1]} : vector<4x128xf32> to vector<1x128xf32>
      %220 = arith.subf %168, %219 : vector<1x128xf32>
      %221 = math.absf %220 : vector<1x128xf32>
      %cst_60 = arith.constant 0.111111112 : f32
      %222 = vector.broadcast %cst_60 : f32 to vector<1x128xf32>
      %223 = arith.cmpf ole, %221, %222 : vector<1x128xf32>
      %cst_61 = arith.constant 4.500000e+00 : f32
      %224 = vector.broadcast %cst_61 : f32 to vector<1x128xf32>
      %225 = arith.mulf %224, %221 : vector<1x128xf32>
      %226 = arith.mulf %225, %221 : vector<1x128xf32>
      %cst_62 = arith.constant 0.055555556 : f32
      %227 = vector.broadcast %cst_62 : f32 to vector<1x128xf32>
      %228 = arith.subf %221, %227 : vector<1x128xf32>
      %229 = arith.select %223, %226, %228 : vector<1x128xi1>, vector<1x128xf32>
      %230 = arith.mulf %229, %102 : vector<1x128xf32>
      %231 = vector.shape_cast %230 : vector<1x128xf32> to vector<1x1x128xf32>
      %cst_63 = arith.constant dense<0.000000e+00> : vector<1xf32>
      %232 = vector.multi_reduction <add>, %231, %cst_63 [1, 2] : vector<1x1x128xf32> to vector<1xf32>
      %233 = vector.shape_cast %232 : vector<1xf32> to vector<1x1x1xf32>
      %234 = vector.extract %233[0, 0, 0] : f32 from vector<1x1x1xf32>
      %235 = arith.addf %218, %234 : f32
      %c0_64 = arith.constant 0 : index
      %c0_65 = arith.constant 0 : index
      %236 = vector.load %arg9[%c0_64, %c0_65] : memref<1x1xf32, #tpu.memory_space<vmem>>, vector<1x1xf32>
      %237 = vector.shape_cast %138 : vector<8x128xf32> to vector<1x8x128xf32>
      %cst_66 = arith.constant dense<0.000000e+00> : vector<1xf32>
      %238 = vector.multi_reduction <add>, %237, %cst_66 [1, 2] : vector<1x8x128xf32> to vector<1xf32>
      %239 = vector.shape_cast %238 : vector<1xf32> to vector<1x1x1xf32>
      %240 = vector.extract %239[0, 0, 0] : f32 from vector<1x1x1xf32>
      %241 = vector.broadcast %240 : f32 to vector<1x1xf32>
      %242 = arith.addf %236, %241 : vector<1x1xf32>
      %c0_67 = arith.constant 0 : index
      %c0_68 = arith.constant 0 : index
      %243 = vector.load %arg9[%c0_67, %c0_68] : memref<1x1xf32, #tpu.memory_space<vmem>>, vector<1x1xf32>
      tpu.vector_store %arg9[%c0_67, %c0_68], %242 {strides = array<i32>} : memref<1x1xf32, #tpu.memory_space<vmem>>, vector<1x1xf32>,
      %c0_69 = arith.constant 0 : index
      %c0_70 = arith.constant 0 : index
      %244 = vector.load %arg10[%c0_69, %c0_70] : memref<1x1xf32, #tpu.memory_space<vmem>>, vector<1x1xf32>
      %245 = vector.shape_cast %102 : vector<1x128xf32> to vector<1x1x128xf32>
      %cst_71 = arith.constant dense<0.000000e+00> : vector<1xf32>
      %246 = vector.multi_reduction <add>, %245, %cst_71 [1, 2] : vector<1x1x128xf32> to vector<1xf32>
      %247 = vector.shape_cast %246 : vector<1xf32> to vector<1x1x1xf32>
      %248 = vector.extract %247[0, 0, 0] : f32 from vector<1x1x1xf32>
      %249 = vector.broadcast %248 : f32 to vector<1x1xf32>
      %250 = arith.addf %244, %249 : vector<1x1xf32>
      %c0_72 = arith.constant 0 : index
      %c0_73 = arith.constant 0 : index
      %251 = vector.load %arg10[%c0_72, %c0_73] : memref<1x1xf32, #tpu.memory_space<vmem>>, vector<1x1xf32>
      tpu.vector_store %arg10[%c0_72, %c0_73], %250 {strides = array<i32>} : memref<1x1xf32, #tpu.memory_space<vmem>>, vector<1x1xf32>,
      %c0_74 = arith.constant 0 : index
      %c0_75 = arith.constant 0 : index
      %252 = vector.load %arg11[%c0_74, %c0_75] : memref<1x1xf32, #tpu.memory_space<vmem>>, vector<1x1xf32>
      %253 = vector.broadcast %235 : f32 to vector<1x1xf32>
      %254 = arith.addf %252, %253 : vector<1x1xf32>
      %c0_76 = arith.constant 0 : index
      %c0_77 = arith.constant 0 : index
      %255 = vector.load %arg11[%c0_76, %c0_77] : memref<1x1xf32, #tpu.memory_space<vmem>>, vector<1x1xf32>
      tpu.vector_store %arg11[%c0_76, %c0_77], %254 {strides = array<i32>} : memref<1x1xf32, #tpu.memory_space<vmem>>, vector<1x1xf32>,
    } else {
    }
    %true = arith.constant true
    %10 = arith.xori %2, %true : i1
    %11 = arith.extui %10 : i1 to i32
    %c0_i32_5 = arith.constant 0 : i32
    %12 = arith.cmpi ne, %11, %c0_i32_5 : i32
    scf.if %12 {
      %cst = arith.constant 7.500000e-01 : f32
      %22 = vector.broadcast %cst : f32 to vector<8x128xf32>
      %23 = arith.mulf %22, %7 : vector<8x128xf32>
      %24 = arith.mulf %23, %7 : vector<8x128xf32>
      %cst_10 = arith.constant 1.000000e+00 : f32
      %25 = vector.broadcast %cst_10 : f32 to vector<8x128xf32>
      %26 = arith.subf %25, %7 : vector<8x128xf32>
      %27 = math.log %26 : vector<8x128xf32>
      %cst_11 = arith.constant 0.000000e+00 : f32
      %28 = vector.broadcast %cst_11 : f32 to vector<8x128xf32>
      %29 = arith.subf %28, %27 : vector<8x128xf32>
      %30 = arith.mulf %24, %29 : vector<8x128xf32>
      %c0_12 = arith.constant 0 : index
      %c0_13 = arith.constant 0 : index
      %31 = vector.load %arg12[%c0_12, %c0_13] : memref<1x1xf32, #tpu.memory_space<vmem>>, vector<1x1xf32>
      %32 = vector.shape_cast %30 : vector<8x128xf32> to vector<1x8x128xf32>
      %cst_14 = arith.constant dense<0.000000e+00> : vector<1xf32>
      %33 = vector.multi_reduction <add>, %32, %cst_14 [1, 2] : vector<1x8x128xf32> to vector<1xf32>
      %34 = vector.shape_cast %33 : vector<1xf32> to vector<1x1x1xf32>
      %35 = vector.extract %34[0, 0, 0] : f32 from vector<1x1x1xf32>
      %36 = vector.broadcast %35 : f32 to vector<1x1xf32>
      %37 = arith.addf %31, %36 : vector<1x1xf32>
      %c0_15 = arith.constant 0 : index
      %c0_16 = arith.constant 0 : index
      %38 = vector.load %arg12[%c0_15, %c0_16] : memref<1x1xf32, #tpu.memory_space<vmem>>, vector<1x1xf32>
      tpu.vector_store %arg12[%c0_15, %c0_16], %37 {strides = array<i32>} : memref<1x1xf32, #tpu.memory_space<vmem>>, vector<1x1xf32>,
    } else {
    }
    %c0_i32_6 = arith.constant 0 : i32
    %13 = arith.cmpi eq, %arg1, %c0_i32_6 : i32
    %14 = tpu.iota {dimensions = array<i32: 1>} : vector<1x2xi32>
    %15 = arith.andi %13, %2 : i1
    %16 = arith.extui %15 : i1 to i32
    %c0_i32_7 = arith.constant 0 : i32
    %17 = arith.cmpi ne, %16, %c0_i32_7 : i32
    scf.if %17 {
      %c0_10 = arith.constant 0 : index
      %c0_11 = arith.constant 0 : index
      %22 = vector.load %arg10[%c0_10, %c0_11] : memref<1x1xf32, #tpu.memory_space<vmem>>, vector<1x1xf32>
      %cst = arith.constant 1.000000e+00 : f32
      %23 = vector.broadcast %cst : f32 to vector<1x1xf32>
      %24 = arith.maximumf %22, %23 : vector<1x1xf32>
      %c0_12 = arith.constant 0 : index
      %c0_13 = arith.constant 0 : index
      %25 = vector.load %arg9[%c0_12, %c0_13] : memref<1x1xf32, #tpu.memory_space<vmem>>, vector<1x1xf32>
      %26 = arith.divf %25, %24 : vector<1x1xf32>
      %cst_14 = arith.constant 0.000000e+00 : f32
      %27 = vector.broadcast %cst_14 : f32 to vector<1x1xf32>
      %28 = arith.cmpf ogt, %22, %27 : vector<1x1xf32>
      %c0_15 = arith.constant 0 : index
      %c0_16 = arith.constant 0 : index
      %29 = vector.load %arg11[%c0_15, %c0_16] : memref<1x1xf32, #tpu.memory_space<vmem>>, vector<1x1xf32>
      %cst_17 = arith.constant 4.000000e+00 : f32
      %30 = vector.broadcast %cst_17 : f32 to vector<1x1xf32>
      %31 = arith.mulf %24, %30 : vector<1x1xf32>
      %32 = arith.divf %29, %31 : vector<1x1xf32>
      %cst_18 = arith.constant 0.000000e+00 : f32
      %33 = vector.broadcast %cst_18 : f32 to vector<1x1xf32>
      %34 = arith.select %28, %32, %33 : vector<1x1xi1>, vector<1x1xf32>
      %c0_i32_19 = arith.constant 0 : i32
      %35 = vector.broadcast %c0_i32_19 : i32 to vector<1x2xi32>
      %36 = arith.cmpi eq, %14, %35 : vector<1x2xi32>
      %37 = vector.shape_cast %26 : vector<1x1xf32> to vector<1x1xf32>
      %38 = vector.broadcast %37 : vector<1x1xf32> to vector<1x2xf32>
      %39 = vector.shape_cast %34 : vector<1x1xf32> to vector<1x1xf32>
      %40 = vector.broadcast %39 : vector<1x1xf32> to vector<1x2xf32>
      %41 = arith.select %36, %38, %40 : vector<1x2xi1>, vector<1x2xf32>
      %c0_20 = arith.constant 0 : index
      %c0_21 = arith.constant 0 : index
      %c0_22 = arith.constant 0 : index
      %42 = vector.load %arg8[%c0_20, %c0_21, %c0_22] : memref<1x1x2xf32, #tpu.memory_space<vmem>>, vector<1x1x2xf32>
      %43 = vector.shape_cast %42 : vector<1x1x2xf32> to vector<1x2xf32>
      %44 = vector.shape_cast %41 : vector<1x2xf32> to vector<1x1x2xf32>
      tpu.vector_store %arg8[%c0_20, %c0_21, %c0_22], %44 {strides = array<i32>} : memref<1x1x2xf32, #tpu.memory_space<vmem>>, vector<1x1x2xf32>,
    } else {
    }
    %true_8 = arith.constant true
    %18 = arith.xori %2, %true_8 : i1
    %19 = arith.andi %13, %18 : i1
    %20 = arith.extui %19 : i1 to i32
    %c0_i32_9 = arith.constant 0 : i32
    %21 = arith.cmpi ne, %20, %c0_i32_9 : i32
    scf.if %21 {
      %c0_i32_10 = arith.constant 0 : i32
      %22 = vector.broadcast %c0_i32_10 : i32 to vector<1x2xi32>
      %23 = arith.cmpi eq, %14, %22 : vector<1x2xi32>
      %c0_11 = arith.constant 0 : index
      %c0_12 = arith.constant 0 : index
      %24 = vector.load %arg12[%c0_11, %c0_12] : memref<1x1xf32, #tpu.memory_space<vmem>>, vector<1x1xf32>
      %25 = vector.shape_cast %24 : vector<1x1xf32> to vector<1x1xf32>
      %26 = vector.broadcast %25 : vector<1x1xf32> to vector<1x2xf32>
      %cst = arith.constant 0.000000e+00 : f32
      %27 = vector.broadcast %cst : f32 to vector<1x2xf32>
      %28 = arith.select %23, %26, %27 : vector<1x2xi1>, vector<1x2xf32>
      %c0_13 = arith.constant 0 : index
      %c0_14 = arith.constant 0 : index
      %c0_15 = arith.constant 0 : index
      %29 = vector.load %arg8[%c0_13, %c0_14, %c0_15] : memref<1x1x2xf32, #tpu.memory_space<vmem>>, vector<1x1x2xf32>
      %30 = vector.shape_cast %29 : vector<1x1x2xf32> to vector<1x2xf32>
      %31 = vector.shape_cast %28 : vector<1x2xf32> to vector<1x1x2xf32>
      tpu.vector_store %arg8[%c0_13, %c0_14, %c0_15], %31 {strides = array<i32>} : memref<1x1x2xf32, #tpu.memory_space<vmem>>, vector<1x1x2xf32>,
    } else {
    }
    return
  }
  func.func @transform_0(%arg0: i32, %arg1: i32, %arg2: memref<3xi32, #tpu.memory_space<smem>>) -> (i32, i32, i32) {
    %c0_i32 = arith.constant 0 : i32
    %c0_i32_0 = arith.constant 0 : i32
    return %arg0, %c0_i32, %arg1 : i32, i32, i32
  }
  func.func @transform_1(%arg0: i32, %arg1: i32, %arg2: memref<3xi32, #tpu.memory_space<smem>>) -> (i32, i32, i32) {
    %c0_i32 = arith.constant 0 : i32
    %c0_i32_0 = arith.constant 0 : i32
    return %arg0, %c0_i32, %arg1 : i32, i32, i32
  }
  func.func @transform_2(%arg0: i32, %arg1: i32, %arg2: memref<3xi32, #tpu.memory_space<smem>>) -> (i32, i32) {
    %c0_i32 = arith.constant 0 : i32
    %c0_i32_0 = arith.constant 0 : i32
    return %c0_i32, %arg1 : i32, i32
  }
  func.func @transform_3(%arg0: i32, %arg1: i32, %arg2: memref<3xi32, #tpu.memory_space<smem>>) -> (i32, i32, i32) {
    %c0_i32 = arith.constant 0 : i32
    %c0_i32_0 = arith.constant 0 : i32
    %c0_i32_1 = arith.constant 0 : i32
    return %arg0, %c0_i32, %c0_i32_0 : i32, i32, i32
  }
  func.func @transform_4(%arg0: i32, %arg1: i32, %arg2: memref<3xi32, #tpu.memory_space<smem>>) -> (i32, i32, i32) {
    %c0_i32 = arith.constant 0 : i32
    %c0_i32_0 = arith.constant 0 : i32
    %c0_i32_1 = arith.constant 0 : i32
    return %arg0, %c0_i32, %c0_i32_0 : i32, i32, i32
  }
  func.func @transform_5(%arg0: i32, %arg1: i32, %arg2: memref<3xi32, #tpu.memory_space<smem>>) -> (i32, i32, i32) {
    %c0_i32 = arith.constant 0 : i32
    %c0_i32_0 = arith.constant 0 : i32
    %c0_i32_1 = arith.constant 0 : i32
    return %arg0, %c0_i32, %c0_i32_0 : i32, i32, i32
  }
}

</mosaic_0001>

<llo_original>
// kernel: retina_loss.1
$region0: #{retina_loss.1}
  #allocation0 [shape = 'u32[]', space=smem, size = 0x4, offset = 0x4, fixed_abs, tag = 'smem constant byte address 0x4 - core index']
  #allocation1 [shape = 'u32[144,128]{1,0:T(1,128)}', space=vmem, size = 0x12000, scoped, tag = 'internal scratch']
  #allocation2 [shape = 'f32[1,1]{1,0:T(1,128)}', space=vmem, size = 0x200, scoped, tag = 'scratch operand']
  #allocation3 [shape = 'f32[1,1]{1,0:T(1,128)}', space=vmem, size = 0x200, scoped, tag = 'scratch operand']
  #allocation4 [shape = 'f32[1,1]{1,0:T(1,128)}', space=vmem, size = 0x200, scoped, tag = 'scratch operand']
  #allocation5 [shape = 'f32[1,1]{1,0:T(1,128)}', space=vmem, size = 0x200, scoped, tag = 'scratch operand']
  #allocation6 [shape = 's32[1]{0}', space=sflag, size = 0x4, scoped, tag = 'scoped memory for retina_loss.1']
  #allocation7 [shape = 'u8[512]{0}', space=smem, size = 0x200, scoped, tag = 'prefetched SMEM operand 0']
  %s0 = inlined_call_operand.vmem [shape: s32[3], index: 0, kind: input, shape index: {}]
  %s1 = inlined_call_operand.vmem [shape: f32[3,8,128], index: 1, kind: input, shape index: {}]
  %s2 = inlined_call_operand.vmem [shape: f32[3,4,128], index: 2, kind: input, shape index: {}]
  %s3 = inlined_call_operand.vmem [shape: f32[12,128], index: 3, kind: input, shape index: {}]
  %s4 = inlined_call_operand.vmem [shape: f32[3,8,4], index: 4, kind: input, shape index: {}]
  %s5 = inlined_call_operand.vmem [shape: f32[3,8,8], index: 5, kind: input, shape index: {}]
  %s6 = inlined_call_operand.vmem [shape: f32[3,1,2], index: 6, kind: output, shape index: {}]
  %s7 = sld [smem:[#allocation0]]
  $region73: #{retina_loss.1} parent=0
    _
  %s9 = ssub.s32 1, %s7
  %s10 = scalar_select 0, %s9, %s7
  %s11 = sshll.u32 %s0, 4
  %s12 = int_to_ptr.vmem [resolvable:$true] %s11
  %14 = dma.vmem_to_smem %s12, 16, [#allocation7], [#allocation6]
  %15 = dma.done [#allocation6], 16
  %16 = sfence
  loop: start=0, step=1, limit=5
  $region2: #{retina_loss.1} parent=0 // loop_pre_header
    _
  $region3: #{retina_loss.1} parent=0 // loop_header
    %s18 = sphi 0, %s22
    %p19 = scmp.ge.s32.totalorder %s18, 5
    %s25 = sphi 0, %s37
    %s26 = sphi 0, %s33
    %s27 = sphi 0, %s25
    %s28 = sphi 0, %s26
    %s29 = sphi 0, %s27
    %s30 = sphi 0, %s28
    %s42 = sphi 0, %s44
    %s45 = sphi 0, %s42
    %s46 = sphi 0, %s45
    %s62 = sphi 0, %s46
    %s70 = sphi 0, %s72
    %s73 = sphi 0, %s70
    %s74 = sphi 0, %s73
    %s90 = sphi 0, %s74
    %s96 = sphi 0, %s98
    %s99 = sphi 0, %s96
    %s100 = sphi 0, %s99
    %s116 = sphi 0, %s100
    %s122 = sphi 0, %s124
    %s125 = sphi 0, %s122
    %s126 = sphi 0, %s125
    %s142 = sphi 0, %s126
    %s148 = sphi 0, %s150
    %s151 = sphi 0, %s148
    %s152 = sphi 0, %s151
    %s168 = sphi 0, %s152
    %s174 = sphi 0, %s176
    %s177 = sphi 0, %s174
    %s178 = sphi 0, %s177
    %s194 = sphi 0, %s178
  $region4: #{retina_loss.1} parent=0 // loop_header_branch
    %21 = sbr.rel (%p19) target = $region8
  $region5: #{retina_loss.1} parent=0 // loop_body
    %s23 = ssub.s32 %s18, 1
    %s24 = ssub.s32 %s18, 2
    %s31 = sadd.s32 1, %s26
    %p32 = scmp.ge.s32.totalorder %s31, 1
    %s33 = scalar_select %p32, 0, %s31
    %s34 = sadd.s32 1, %s25
    %s35 = scalar_select %p32, %s34, %s25
    %p36 = scmp.ge.s32.totalorder %s35, 3
    %s37 = scalar_select %p36, 0, %s35
    %s38 = ssub.s32 %s25, %s37
    %s39 = ssub.s32 %s26, %s33
    %s40 = sor.u32 %s38, %s39
    %p41 = scmp.eq.s32.totalorder %s40, 0
    %s43 = sadd.s32 %s42, 1
    %s44 = scalar_select %p41, %s42, %s43
    %p47 = pneg %p41
    %p48 = scmp.eq.s32.totalorder %s18, 2
    %p49 = por %p47, %p48
    %p50 = scmp.ne.s32.totalorder %s42, %s45
    %p51 = scmp.eq.s32.totalorder %s18, 0
    %p52 = por %p50, %p51
    %p53 = scmp.ne.s32.totalorder %s42, %s45
    %p54 = scmp.eq.s32.totalorder %s23, 2
    %p55 = por %p53, %p54
    %p56 = scmp.ne.s32.totalorder %s45, %s46
    %p57 = scmp.eq.s32.totalorder %s23, 0
    %p58 = por %p56, %p57
    %p59 = scmp.ne.s32.totalorder %s45, %s46
    %p60 = scmp.eq.s32.totalorder %s24, 2
    %p61 = por %p59, %p60
    %p63 = scmp.ne.s32.totalorder %s46, %s62
    %p64 = scmp.eq.s32.totalorder %s24, 0
    %p65 = por %p63, %p64
    %s66 = ssub.s32 %s25, %s37
    %s67 = ssub.s32 %s26, %s33
    %s68 = sor.u32 %s66, %s67
    %p69 = scmp.eq.s32.totalorder %s68, 0
    %s71 = sadd.s32 %s70, 1
    %s72 = scalar_select %p69, %s70, %s71
    %p75 = pneg %p69
    %p76 = scmp.eq.s32.totalorder %s18, 2
    %p77 = por %p75, %p76
    %p78 = scmp.ne.s32.totalorder %s70, %s73
    %p79 = scmp.eq.s32.totalorder %s18, 0
    %p80 = por %p78, %p79
    %p81 = scmp.ne.s32.totalorder %s70, %s73
    %p82 = scmp.eq.s32.totalorder %s23, 2
    %p83 = por %p81, %p82
    %p84 = scmp.ne.s32.totalorder %s73, %s74
    %p85 = scmp.eq.s32.totalorder %s23, 0
    %p86 = por %p84, %p85
    %p87 = scmp.ne.s32.totalorder %s73, %s74
    %p88 = scmp.eq.s32.totalorder %s24, 2
    %p89 = por %p87, %p88
    %p91 = scmp.ne.s32.totalorder %s74, %s90
    %p92 = scmp.eq.s32.totalorder %s24, 0
    %p93 = por %p91, %p92
    %s94 = ssub.s32 %s26, %s33
    %p95 = scmp.eq.s32.totalorder %s94, 0
    %s97 = sadd.s32 %s96, 1
    %s98 = scalar_select %p95, %s96, %s97
    %p101 = pneg %p95
    %p102 = scmp.eq.s32.totalorder %s18, 2
    %p103 = por %p101, %p102
    %p104 = scmp.ne.s32.totalorder %s96, %s99
    %p105 = scmp.eq.s32.totalorder %s18, 0
    %p106 = por %p104, %p105
    %p107 = scmp.ne.s32.totalorder %s96, %s99
    %p108 = scmp.eq.s32.totalorder %s23, 2
    %p109 = por %p107, %p108
    %p110 = scmp.ne.s32.totalorder %s99, %s100
    %p111 = scmp.eq.s32.totalorder %s23, 0
    %p112 = por %p110, %p111
    %p113 = scmp.ne.s32.totalorder %s99, %s100
    %p114 = scmp.eq.s32.totalorder %s24, 2
    %p115 = por %p113, %p114
    %p117 = scmp.ne.s32.totalorder %s100, %s116
    %p118 = scmp.eq.s32.totalorder %s24, 0
    %p119 = por %p117, %p118
    %s120 = ssub.s32 %s25, %s37
    %p121 = scmp.eq.s32.totalorder %s120, 0
    %s123 = sadd.s32 %s122, 1
    %s124 = scalar_select %p121, %s122, %s123
    %p127 = pneg %p121
    %p128 = scmp.eq.s32.totalorder %s18, 2
    %p129 = por %p127, %p128
    %p130 = scmp.ne.s32.totalorder %s122, %s125
    %p131 = scmp.eq.s32.totalorder %s18, 0
    %p132 = por %p130, %p131
    %p133 = scmp.ne.s32.totalorder %s122, %s125
    %p134 = scmp.eq.s32.totalorder %s23, 2
    %p135 = por %p133, %p134
    %p136 = scmp.ne.s32.totalorder %s125, %s126
    %p137 = scmp.eq.s32.totalorder %s23, 0
    %p138 = por %p136, %p137
    %p139 = scmp.ne.s32.totalorder %s125, %s126
    %p140 = scmp.eq.s32.totalorder %s24, 2
    %p141 = por %p139, %p140
    %p143 = scmp.ne.s32.totalorder %s126, %s142
    %p144 = scmp.eq.s32.totalorder %s24, 0
    %p145 = por %p143, %p144
    %s146 = ssub.s32 %s25, %s37
    %p147 = scmp.eq.s32.totalorder %s146, 0
    %s149 = sadd.s32 %s148, 1
    %s150 = scalar_select %p147, %s148, %s149
    %p153 = pneg %p147
    %p154 = scmp.eq.s32.totalorder %s18, 2
    %p155 = por %p153, %p154
    %p156 = scmp.ne.s32.totalorder %s148, %s151
    %p157 = scmp.eq.s32.totalorder %s18, 0
    %p158 = por %p156, %p157
    %p159 = scmp.ne.s32.totalorder %s148, %s151
    %p160 = scmp.eq.s32.totalorder %s23, 2
    %p161 = por %p159, %p160
    %p162 = scmp.ne.s32.totalorder %s151, %s152
    %p163 = scmp.eq.s32.totalorder %s23, 0
    %p164 = por %p162, %p163
    %p165 = scmp.ne.s32.totalorder %s151, %s152
    %p166 = scmp.eq.s32.totalorder %s24, 2
    %p167 = por %p165, %p166
    %p169 = scmp.ne.s32.totalorder %s152, %s168
    %p170 = scmp.eq.s32.totalorder %s24, 0
    %p171 = por %p169, %p170
    %s172 = ssub.s32 %s25, %s37
    %p173 = scmp.eq.s32.totalorder %s172, 0
    %s175 = sadd.s32 %s174, 1
    %s176 = scalar_select %p173, %s174, %s175
    %p179 = pneg %p173
    %p180 = scmp.eq.s32.totalorder %s18, 2
    %p181 = por %p179, %p180
    %p182 = scmp.ne.s32.totalorder %s174, %s177
    %p183 = scmp.eq.s32.totalorder %s18, 0
    %p184 = por %p182, %p183
    %p185 = scmp.ne.s32.totalorder %s174, %s177
    %p186 = scmp.eq.s32.totalorder %s23, 2
    %p187 = por %p185, %p186
    %p188 = scmp.ne.s32.totalorder %s177, %s178
    %p189 = scmp.eq.s32.totalorder %s23, 0
    %p190 = por %p188, %p189
    %p191 = scmp.ne.s32.totalorder %s177, %s178
    %p192 = scmp.eq.s32.totalorder %s24, 2
    %p193 = por %p191, %p192
    %p195 = scmp.ne.s32.totalorder %s178, %s194
    %p196 = scmp.eq.s32.totalorder %s24, 0
    %p197 = por %p195, %p196
    %p198 = scmp.le.s32.totalorder 1, %s18
    %p199 = scmp.lt.s32.totalorder %s18, 4
    %p200 = pnand %p198, %p199
    %p201 = pneg %p200
    // Predicated region
    $region9: #{retina_loss.1} parent=5 // pred_check
      _
    $region10: #{retina_loss.1} parent=5 // pred_check_branch
      %203 = sbr.rel (%p200) target = $region12
    $region11: #{retina_loss.1} parent=5 // pred_region
      %s204 = ssub.s32 %s18, 1
      // Predicated region
      $region13: #{retina_loss.1} parent=11 // pred_check
        %p205 = pneg %p112
      $region14: #{retina_loss.1} parent=11 // pred_check_branch
        %207 = sbr.rel (%p205) target = $region16
      $region15: #{retina_loss.1} parent=11 // pred_region
        %p208 = scmp.lt.s32.totalorder %s28, 0
        %s209 = scalar_select %p208, %s28, 0
        %s210 = smul.addr %s209, 8
        %s211 = scalar_lea.vmem %s3, %s210
      $region16: #{retina_loss.1} parent=11 // pred_fallthru
        _
    $region12: #{retina_loss.1} parent=5 // pred_fallthru
      _
    %p212 = scmp.lt.s32.totalorder %s18, 3
    // Predicated region
    $region17: #{retina_loss.1} parent=5 // pred_check
      %p213 = pneg %p212
    $region18: #{retina_loss.1} parent=5 // pred_check_branch
      %215 = sbr.rel (%p213) target = $region20
    $region19: #{retina_loss.1} parent=5 // pred_region
      // Predicated region
      $region21: #{retina_loss.1} parent=19 // pred_check
        %p216 = pneg %p52
      $region22: #{retina_loss.1} parent=19 // pred_check_branch
        %218 = sbr.rel (%p216) target = $region24
      $region23: #{retina_loss.1} parent=19 // pred_region
        %p219 = scmp.lt.s32.totalorder %s25, 2
        %s220 = scalar_select %p219, %s25, 2
        %p221 = scmp.lt.s32.totalorder %s26, 0
        %s222 = scalar_select %p221, %s26, 0
        %s223 = sadd.s32 %s222, %s220
        %s224 = smul.addr %s223, 8
        %s225 = scalar_lea.vmem %s1, %s224
      $region24: #{retina_loss.1} parent=19 // pred_fallthru
        _
      // Predicated region
      $region25: #{retina_loss.1} parent=19 // pred_check
        %p226 = pneg %p80
      $region26: #{retina_loss.1} parent=19 // pred_check_branch
        %228 = sbr.rel (%p226) target = $region28
      $region27: #{retina_loss.1} parent=19 // pred_region
        %p229 = scmp.lt.s32.totalorder %s25, 2
        %s230 = scalar_select %p229, %s25, 2
        %p231 = scmp.lt.s32.totalorder %s26, 0
        %s232 = scalar_select %p231, %s26, 0
        %s233 = sadd.s32 %s232, %s230
        %s234 = smul.addr %s233, 4
        %s235 = scalar_lea.vmem %s2, %s234
      $region28: #{retina_loss.1} parent=19 // pred_fallthru
        _
      // Predicated region
      $region29: #{retina_loss.1} parent=19 // pred_check
        %p236 = pneg %p132
      $region30: #{retina_loss.1} parent=19 // pred_check_branch
        %238 = sbr.rel (%p236) target = $region32
      $region31: #{retina_loss.1} parent=19 // pred_region
        %p239 = scmp.lt.s32.totalorder %s25, 2
        %s240 = scalar_select %p239, %s25, 2
        %s241 = smul.addr %s240, 8
        %s242 = scalar_lea.vmem %s4, %s241
      $region32: #{retina_loss.1} parent=19 // pred_fallthru
        _
      // Predicated region
      $region33: #{retina_loss.1} parent=19 // pred_check
        %p243 = pneg %p158
      $region34: #{retina_loss.1} parent=19 // pred_check_branch
        %245 = sbr.rel (%p243) target = $region36
      $region35: #{retina_loss.1} parent=19 // pred_region
        %p246 = scmp.lt.s32.totalorder %s25, 2
        %s247 = scalar_select %p246, %s25, 2
        %s248 = smul.addr %s247, 8
        %s249 = scalar_lea.vmem %s5, %s248
      $region36: #{retina_loss.1} parent=19 // pred_fallthru
        _
    $region20: #{retina_loss.1} parent=5 // pred_fallthru
      _
    %p250 = scmp.le.s32.totalorder 1, %s18
    %p251 = scmp.lt.s32.totalorder %s18, 4
    %p252 = pnand %p250, %p251
    %p253 = pneg %p252
    // Predicated region
    $region37: #{retina_loss.1} parent=5 // pred_check
      _
    $region38: #{retina_loss.1} parent=5 // pred_check_branch
      %255 = sbr.rel (%p252) target = $region40
    $region39: #{retina_loss.1} parent=5 // pred_region
      %s256 = ssub.s32 %s18, 1
      %p257 = scmp.lt.s32.totalorder %s27, 2
      %s258 = scalar_select %p257, %s27, 2
      %p259 = scmp.lt.s32.totalorder %s28, 0
      %s260 = scalar_select %p259, %s28, 0
      %s261 = sadd.s32 %s260, %s258
      %s262 = smul.addr %s261, 8
      %s263 = scalar_lea.vmem %s1, %s262
      %p264 = pneg %p58
      %p265 = pneg %p55
      %p266 = scmp.lt.s32.totalorder %s27, 2
      %s267 = scalar_select %p266, %s27, 2
      %p268 = scmp.lt.s32.totalorder %s28, 0
      %s269 = scalar_select %p268, %s28, 0
      %s270 = sadd.s32 %s269, %s267
      %s271 = smul.addr %s270, 4
      %s272 = scalar_lea.vmem %s2, %s271
      %p273 = pneg %p86
      %p274 = pneg %p83
      %p275 = scmp.lt.s32.totalorder %s28, 0
      %s276 = scalar_select %p275, %s28, 0
      %s277 = smul.addr %s276, 8
      %s278 = scalar_lea.vmem %s3, %s277
      %p279 = pneg %p112
      %p280 = pneg %p109
      %p281 = scmp.lt.s32.totalorder %s27, 2
      %s282 = scalar_select %p281, %s27, 2
      %s283 = smul.addr %s282, 8
      %s284 = scalar_lea.vmem %s4, %s283
      %p285 = pneg %p138
      %p286 = pneg %p135
      %p287 = scmp.lt.s32.totalorder %s27, 2
      %s288 = scalar_select %p287, %s27, 2
      %s289 = smul.addr %s288, 8
      %s290 = scalar_lea.vmem %s5, %s289
      %p291 = pneg %p164
      %p292 = pneg %p161
      %p293 = pneg %p190
      %p294 = pneg %p187
      %p295 = scmp.lt.s32.totalorder %s27, 2
      %s296 = scalar_select %p295, %s27, 2
      %s297 = scalar_lea.vmem %s6, %s296
      %p298 = scmp.lt.s32.totalorder %s27, 2
      %s299 = scalar_select %p298, %s27, 2
      %p300 = scmp.lt.s32.totalorder %s28, 0
      %s301 = scalar_select %p300, %s28, 0
      %s302 = sadd.s32 %s301, %s299
      %s303 = smul.addr %s302, 8
      %s304 = scalar_lea.vmem %s1, %s303
      %p305 = scmp.lt.s32.totalorder %s27, 2
      %s306 = scalar_select %p305, %s27, 2
      %p307 = scmp.lt.s32.totalorder %s28, 0
      %s308 = scalar_select %p307, %s28, 0
      %s309 = sadd.s32 %s308, %s306
      %s310 = smul.addr %s309, 4
      %s311 = scalar_lea.vmem %s2, %s310
      %p312 = scmp.lt.s32.totalorder %s28, 0
      %s313 = scalar_select %p312, %s28, 0
      %s314 = smul.addr %s313, 8
      %s315 = scalar_lea.vmem %s3, %s314
      %p316 = scmp.lt.s32.totalorder %s27, 2
      %s317 = scalar_select %p316, %s27, 2
      %s318 = smul.addr %s317, 8
      %s319 = scalar_lea.vmem %s4, %s318
      %p320 = scmp.lt.s32.totalorder %s27, 2
      %s321 = scalar_select %p320, %s27, 2
      %s322 = smul.addr %s321, 8
      %s323 = scalar_lea.vmem %s5, %s322
      %p324 = scmp.lt.s32.totalorder %s27, 2
      %s325 = scalar_select %p324, %s27, 2
      %s326 = scalar_lea.vmem %s6, %s325
      %s327 = sld [smem:[#allocation7 + %s27]]
      %p328 = scmp.gt.s32.totalorder %s327, 0
      %p329 = scmp.eq.s32.totalorder %s28, 0
      // Predicated region
      $region41: #{retina_loss.1} parent=39 // pred_check
        %p330 = pneg %p329
      $region42: #{retina_loss.1} parent=39 // pred_check_branch
        %332 = sbr.rel (%p330) target = $region44
      $region43: #{retina_loss.1} parent=39 // pred_region
        %vm333 = vcmask 0
        %334 = vst.msk [vmem:[#allocation2] sm:$0x1] %vm333, 0.0
        %335 = vst.msk [vmem:[#allocation3] sm:$0x1] %vm333, 0.0
        %336 = vst.msk [vmem:[#allocation4] sm:$0x1] %vm333, 0.0
        %337 = vst.msk [vmem:[#allocation5] sm:$0x1] %vm333, 0.0
      $region44: #{retina_loss.1} parent=39 // pred_fallthru
        _
      %v338 = vld [vmem:[%s304] sm:$0xff]
      // Predicated region
      $region45: #{retina_loss.1} parent=39 // pred_check
        %p339 = pneg %p328
      $region46: #{retina_loss.1} parent=39 // pred_check_branch
        %341 = sbr.rel (%p339) target = $region48
      $region47: #{retina_loss.1} parent=39 // pred_region
        %v342 = vld [vmem:[%s311] sm:$0xf]
        %v343 = vld [vmem:[%s315] sm:$0xff]
        %v344 = vld [vmem:[%s315 + $0x8] sm:$0xf]
        %v345 = vld [vmem:[%s319] sm:$0xff]
        %v346 = vld [vmem:[%s323] sm:$0xff]
        %vm347 = vcmp.ne.f32.partialorder %v345, -1.0
        %349 = vrot.lane.b32.xlu0 %v345, 2
        %v350 = vpop.permute.xlu0 %349
        %v352 = vsub.f32 %v345, %v350
        %354 = vrot.lane.b32.xlu0 %v352, 127
        %v355 = vpop.permute.xlu0 %354
        %v357 = vmul.f32 %v352, %v355
        %v358 = vlaneseq
        %v359 = vshrl.u32 %v358, 7
        %v360 = vsub.s32 2, %v359
        %v361 = vrot.slane %v343, %v360
        %362 = vset.pattern.permute.xlu0 2
        %363 = vperm.xlu0 %362, %v345
        %v364 = vpop.permute.xlu0 %363
        %v366 = vmin.f32 %v361, %v364
        %v367 = vlaneseq
        %v368 = vshrl.u32 %v367, 7
        %v369 = vsub.s32 0, %v368
        %v370 = vrot.slane %v343, %v369
        %371 = vset.pattern.permute.xlu0 0
        %372 = vperm.xlu0 %371, %v345
        %v373 = vpop.permute.xlu0 %372
        %v375 = vmax.f32 %v370, %v373
        %v376 = vsub.f32 %v366, %v375
        %v377 = vmax.f32 %v376, 0.0
        %v378 = vlaneseq
        %v379 = vshrl.u32 %v378, 7
        %v380 = vsub.s32 3, %v379
        %v381 = vrot.slane %v343, %v380
        %382 = vset.pattern.permute.xlu0 3
        %383 = vperm.xlu0 %382, %v345
        %v384 = vpop.permute.xlu0 %383
        %v386 = vmin.f32 %v381, %v384
        %v387 = vlaneseq
        %v388 = vshrl.u32 %v387, 7
        %v389 = vsub.s32 1, %v388
        %v390 = vrot.slane %v343, %v389
        %391 = vset.pattern.permute.xlu0 1
        %392 = vperm.xlu0 %391, %v345
        %v393 = vpop.permute.xlu0 %392
        %v395 = vmax.f32 %v390, %v393
        %v396 = vsub.f32 %v386, %v395
        %v397 = vmax.f32 %v396, 0.0
        %v398 = vmul.f32 %v377, %v397
        %v399 = vlaneseq
        %v400 = vshrl.u32 %v399, 7
        %v401 = vsub.s32 2, %v400
        %v402 = vrot.slane %v344, %v401
        %404 = vset.pattern.permute.xlu0 2
        %405 = vperm.xlu0 %404, %v357
        %v406 = vpop.permute.xlu0 %405
        %v408 = vadd.f32 %v402, %v406
        %v409 = vsub.f32 %v408, %v398
        %v410 = vmax.f32 %v409, 1e-08
        %v411 = vrcp.pop %v410
        %v412 = vmul.f32 %v398, %v411
        %v413 = vsel %vm347, 1, 0
        %414 = vset.pattern.permute.xlu0 0
        %415 = vperm.xlu0 %414, %v413
        %v416 = vpop.permute.xlu0 %415
        %vm417 = vcmp.eq.s32.totalorder %v416, 1
        %v418 = vsel %vm417, %v412, -1.0
        %v419 = vrot.slane %v418, 4
        %v420 = vmax.f32 %v418, %v419
        %v421 = vrot.slane %v420, 2
        %v422 = vmax.f32 %v420, %v421
        %v423 = vrot.slane %v422, 1
        %v424 = vmax.f32 %v422, %v423
        %v425 = vlaneseq
        %v426 = vshrl.u32 %v425, 7
        %vm427 = vcmp.eq.f32.partialorder %v418, %v424
        %v428 = vsel %vm427, %v426, 8
        %v429 = vrot.slane %v428, 4
        %vm430 = vcmp.lt.s32.totalorder %v428, %v429
        %v431 = vsel %vm430, %v428, %v429
        %v432 = vrot.slane %v431, 2
        %vm433 = vcmp.lt.s32.totalorder %v431, %v432
        %v434 = vsel %vm433, %v431, %v432
        %v435 = vrot.slane %v434, 1
        %vm436 = vcmp.lt.s32.totalorder %v434, %v435
        %v437 = vsel %vm436, %v434, %v435
        %vm438 = vcmp.eq.s32.totalorder %v426, %v437
        %v439 = vsel %vm438, 1, 0
        %v440 = vcvt.s32.f32 %v439
        %vm441 = vcmask 64512
        %v443 = vsel %vm441, %v346, 0
        %445 = vmatprep.subr.mxu0 0.0
        %446 = vmatpush1.msra.mxu0 %v440
        %447 = vmatprep.subr.mxu0 0.0
        %448 = vmatpush1.msra.mxu0 0.0
        %449 = vmatprep.subr.mxu0 0.0
        %450 = vmatpush1.msra.mxu0 0.0
        %451 = vmatprep.subr.mxu0 0.0
        %452 = vmatpush1.msra.mxu0 0.0
        %453 = vmatprep.subr.mxu0 0.0
        %454 = vmatpush1.msra.mxu0 0.0
        %455 = vmatprep.subr.mxu0 0.0
        %456 = vmatpush1.msra.mxu0 0.0
        %457 = vmatprep.subr.mxu0 0.0
        %458 = vmatpush1.msra.mxu0 0.0
        %459 = vmatprep.subr.mxu0 0.0
        %460 = vmatpush1.msra.mxu0 0.0
        %461 = vmatprep.subr.mxu0 0.0
        %462 = vmatpush1.msra.mxu0 0.0
        %463 = vmatprep.subr.mxu0 0.0
        %464 = vmatpush1.msra.mxu0 0.0
        %465 = vmatprep.subr.mxu0 0.0
        %466 = vmatpush1.msra.mxu0 0.0
        %467 = vmatprep.subr.mxu0 0.0
        %468 = vmatpush1.msra.mxu0 0.0
        %469 = vmatprep.subr.mxu0 0.0
        %470 = vmatpush1.msra.mxu0 0.0
        %471 = vmatprep.subr.mxu0 0.0
        %472 = vmatpush1.msra.mxu0 0.0
        %473 = vmatprep.subr.mxu0 0.0
        %474 = vmatpush1.msra.mxu0 0.0
        %475 = vmatprep.subr.mxu0 0.0
        %476 = vmatpush1.msra.mxu0 0.0
        %477 = vmatprep.subr.mxu0 0.0
        %478 = vmatpush1.msra.mxu0 0.0
        %479 = vmatprep.subr.mxu0 0.0
        %480 = vmatpush1.msra.mxu0 0.0
        %481 = vmatprep.subr.mxu0 0.0
        %482 = vmatpush1.msra.mxu0 0.0
        %483 = vmatprep.subr.mxu0 0.0
        %484 = vmatpush1.msra.mxu0 0.0
        %485 = vmatprep.subr.mxu0 0.0
        %486 = vmatpush1.msra.mxu0 0.0
        %487 = vmatprep.subr.mxu0 0.0
        %488 = vmatpush1.msra.mxu0 0.0
        %489 = vmatprep.subr.mxu0 0.0
        %490 = vmatpush1.msra.mxu0 0.0
        %491 = vmatprep.subr.mxu0 0.0
        %492 = vmatpush1.msra.mxu0 0.0
        %493 = vmatprep.subr.mxu0 0.0
        %494 = vmatpush1.msra.mxu0 0.0
        %495 = vmatprep.subr.mxu0 0.0
        %496 = vmatpush1.msra.mxu0 0.0
        %497 = vmatprep.subr.mxu0 0.0
        %498 = vmatpush1.msra.mxu0 0.0
        %499 = vmatprep.subr.mxu0 0.0
        %500 = vmatpush1.msra.mxu0 0.0
        %501 = vmatprep.subr.mxu0 0.0
        %502 = vmatpush1.msra.mxu0 0.0
        %503 = vmatprep.subr.mxu0 0.0
        %504 = vmatpush1.msra.mxu0 0.0
        %505 = vmatprep.subr.mxu0 0.0
        %506 = vmatpush1.msra.mxu0 0.0
        %507 = vmatprep.subr.mxu0 0.0
        %508 = vmatpush1.msra.mxu0 0.0
        %509 = vmatprep.mubr.f32.mxu0 0.0
        %510 = vmatmul.mubr.f32.gmra.mrb[0].mxu0 %v443
        %v511 = vpop.f32.mrb[0].mxu0
        %v512 = vadd.f32 0.0, %v511
        %v513 = vpop.f32.mrb[0].mxu0
        %514 = vdwg.mxu0
        %vm515 = vcmp.ge.f32.partialorder %v424, 0.5
        %v516 = vsel %vm515, 1, 0
        %v517 = vcvt.s32.f32 %v516
        %v518 = vmax.f32 %v338, 0.0001
        %v519 = vmin.f32 %v518, 0.9999
        %v520 = vcvt.f32.s32.to.zero.pseudo %v512
        %v521 = vsub.s32 %v520, 1
        %v522 = vlaneseq
        %v523 = vshrl.u32 %v522, 7
        %v524 = vsub.s32 0, %v523
        %v525 = vrot.slane %v521, %v524
        %vm526 = vcmp.eq.s32.totalorder %v426, %v525
        %vm527 = vcmp.eq.s32.totalorder %v516, 1
        %vm528 = vmand %vm527, %vm526
        %v529 = vsub.f32 1.0, %v519
        %v530 = vsel %vm528, %v519, %v529
        %v531 = vlog2.pop %v530
        %v532 = vmul.f32 %v531, 0.6931472
        %v533 = vsub.f32 0.0, %v532
        %v534 = vsel %vm528, 0.25, 0.75
        %v535 = vsub.f32 1.0, %v530
        %v536 = vmul.f32 %v534, %v535
        %v537 = vmul.f32 %v536, %v535
        %v538 = vmul.f32 %v537, %v533
        %vm539 = vmxor %vm515, 1
        %vm540 = vcmp.ge.f32.partialorder %v424, 0.4
        %vm541 = vmand %vm539, %vm540
        %v542 = vsel %vm541, 1, 0
        %vm543 = vcmp.eq.s32.totalorder %v542, 1
        %v544 = vsel %vm543, 0.0, %v538
        %v546 = vrot.slane %v512, 6
        %v548 = vsub.f32 %v512, %v546
        %v549 = vmax.f32 %v548, 1.0
        %v550 = vmul.f32 %v548, 0.5
        %v552 = vrot.slane %v550, 2
        %v554 = vadd.f32 %v512, %v552
        %v556 = vrot.slane %v343, 3
        %v558 = vsub.f32 %v554, %v556
        %v559 = vrot.slane %v343, 5
        %v561 = vmul.f32 %v558, %v559
        %v562 = vmul.f32 %v561, 10.0
        %v563 = vlog2.pop %v549
        %v564 = vmul.f32 %v563, 0.6931472
        %v566 = vrot.slane %v344, 5
        %v568 = vsub.f32 %v564, %v566
        %v569 = vmul.f32 %v568, 5.0
        %v571 = vrot.slane %v342, 7
        %v573 = vsub.f32 %v562, %v571
        %v574 = vand.u32 2147483647, %v573
        %vm575 = vcmp.le.f32.partialorder %v574, 0.11111111
        %v576 = vmul.f32 %v574, 4.5
        %v577 = vmul.f32 %v576, %v574
        %v578 = vsub.f32 %v574, 0.055555556
        %v579 = vsel %vm575, %v577, %v578
        %v580 = vmul.f32 %v579, %v517
        %v582 = vrot.slane %v580, 1
        %vm584 = vcmask 1040384
        %v585 = vsel %vm584, %v582, 0.0
        %586 = vadd.xlane.f32.xlu0 %v585
        %v587 = vpop.xlane.xlu0 %586
        %v588 = vrot.slane %v587, 4
        %v589 = vadd.f32 %v587, %v588
        %v590 = vrot.slane %v589, 2
        %v591 = vadd.f32 %v589, %v590
        %v592 = vrot.slane %v591, 1
        %v593 = vadd.f32 %v591, %v592
        %s594 = vtos %v593
        %v595 = vrot.slane %v580, 2
        %v597 = vsel %vm584, %v595, 0.0
        %598 = vadd.xlane.f32.xlu0 %v597
        %v599 = vpop.xlane.xlu0 %598
        %v600 = vrot.slane %v599, 4
        %v601 = vadd.f32 %v599, %v600
        %v602 = vrot.slane %v601, 2
        %v603 = vadd.f32 %v601, %v602
        %v604 = vrot.slane %v603, 1
        %v605 = vadd.f32 %v603, %v604
        %s606 = vtos %v605
        %s607 = sadd.f32 %s594, %s606
        %v608 = vsub.f32 %v569, %v571
        %v609 = vand.u32 2147483647, %v608
        %vm610 = vcmp.le.f32.partialorder %v609, 0.11111111
        %v611 = vmul.f32 %v609, 4.5
        %v612 = vmul.f32 %v611, %v609
        %v613 = vsub.f32 %v609, 0.055555556
        %v614 = vsel %vm610, %v612, %v613
        %v615 = vmul.f32 %v614, %v517
        %v617 = vrot.slane %v615, 3
        %v619 = vsel %vm584, %v617, 0.0
        %620 = vadd.xlane.f32.xlu0 %v619
        %v621 = vpop.xlane.xlu0 %620
        %v622 = vrot.slane %v621, 4
        %v623 = vadd.f32 %v621, %v622
        %v624 = vrot.slane %v623, 2
        %v625 = vadd.f32 %v623, %v624
        %v626 = vrot.slane %v625, 1
        %v627 = vadd.f32 %v625, %v626
        %s628 = vtos %v627
        %s629 = sadd.f32 %s607, %s628
        %v630 = vrot.slane %v615, 4
        %v632 = vsel %vm584, %v630, 0.0
        %633 = vadd.xlane.f32.xlu0 %v632
        %v634 = vpop.xlane.xlu0 %633
        %v635 = vrot.slane %v634, 4
        %v636 = vadd.f32 %v634, %v635
        %v637 = vrot.slane %v636, 2
        %v638 = vadd.f32 %v636, %v637
        %v639 = vrot.slane %v638, 1
        %v640 = vadd.f32 %v638, %v639
        %s641 = vtos %v640
        %s642 = sadd.f32 %s629, %s641
        %v643 = vld [vmem:[#allocation2] sm:$0x1]
        %644 = vadd.xlane.f32.xlu0 %v544
        %v645 = vpop.xlane.xlu0 %644
        %v646 = vrot.slane %v645, 4
        %v647 = vadd.f32 %v645, %v646
        %v648 = vrot.slane %v647, 2
        %v649 = vadd.f32 %v647, %v648
        %v650 = vrot.slane %v649, 1
        %v651 = vadd.f32 %v649, %v650
        %s652 = vtos %v651
        %v653 = vstv %s652
        %v654 = vadd.f32 %v643, %v653
        %vm655 = vcmask 0
        %656 = vst.msk [vmem:[#allocation2] sm:$0x1] %vm655, %v654
        %v657 = vld [vmem:[#allocation3] sm:$0x1]
        %v658 = vsel %vm584, %v517, 0.0
        %659 = vadd.xlane.f32.xlu0 %v658
        %v660 = vpop.xlane.xlu0 %659
        %v661 = vrot.slane %v660, 4
        %v662 = vadd.f32 %v660, %v661
        %v663 = vrot.slane %v662, 2
        %v664 = vadd.f32 %v662, %v663
        %v665 = vrot.slane %v664, 1
        %v666 = vadd.f32 %v664, %v665
        %s667 = vtos %v666
        %v668 = vstv %s667
        %v669 = vadd.f32 %v657, %v668
        %670 = vst.msk [vmem:[#allocation3] sm:$0x1] %vm655, %v669
        %v671 = vld [vmem:[#allocation4] sm:$0x1]
        %v672 = vstv %s642
        %v673 = vadd.f32 %v671, %v672
        %674 = vst.msk [vmem:[#allocation4] sm:$0x1] %vm655, %v673
      $region48: #{retina_loss.1} parent=39 // pred_fallthru
        _
      %p675 = scmp.le.s32.totalorder %s327, 0
      // Predicated region
      $region49: #{retina_loss.1} parent=39 // pred_check
        %p676 = pneg %p675
      $region50: #{retina_loss.1} parent=39 // pred_check_branch
        %678 = sbr.rel (%p676) target = $region52
      $region51: #{retina_loss.1} parent=39 // pred_region
        %v679 = vmul.f32 %v338, 0.75
        %v680 = vmul.f32 %v679, %v338
        %v681 = vsub.f32 1.0, %v338
        %v682 = vlog2.pop %v681
        %v683 = vmul.f32 %v682, 0.6931472
        %v684 = vsub.f32 0.0, %v683
        %v685 = vmul.f32 %v680, %v684
        %v686 = vld [vmem:[#allocation5] sm:$0x1]
        %687 = vadd.xlane.f32.xlu0 %v685
        %v688 = vpop.xlane.xlu0 %687
        %v689 = vrot.slane %v688, 4
        %v690 = vadd.f32 %v688, %v689
        %v691 = vrot.slane %v690, 2
        %v692 = vadd.f32 %v690, %v691
        %v693 = vrot.slane %v692, 1
        %v694 = vadd.f32 %v692, %v693
        %s695 = vtos %v694
        %v696 = vstv %s695
        %v697 = vadd.f32 %v686, %v696
        %vm698 = vcmask 0
        %699 = vst.msk [vmem:[#allocation5] sm:$0x1] %vm698, %v697
      $region52: #{retina_loss.1} parent=39 // pred_fallthru
        _
      %v700 = vlaneseq
      %v701 = vand.u32 %v700, 127
      %p702 = pnand %p329, %p328
      %p703 = pneg %p702
      // Predicated region
      $region53: #{retina_loss.1} parent=39 // pred_check
        _
      $region54: #{retina_loss.1} parent=39 // pred_check_branch
        %705 = sbr.rel (%p702) target = $region56
      $region55: #{retina_loss.1} parent=39 // pred_region
        %v706 = vld [vmem:[#allocation3] sm:$0x1]
        %v707 = vmax.f32 %v706, 1.0
        %v708 = vld [vmem:[#allocation2] sm:$0x1]
        %v709 = vrcp.pop %v707
        %v710 = vmul.f32 %v708, %v709
        %vm711 = vcmp.gt.f32.partialorder %v706, 0.0
        %v712 = vld [vmem:[#allocation4] sm:$0x1]
        %v713 = vmul.f32 %v707, 4.0
        %v714 = vrcp.pop %v713
        %v715 = vmul.f32 %v712, %v714
        %v716 = vsel %vm711, %v715, 0.0
        %vm717 = vcmp.eq.s32.totalorder %v701, 0
        %719 = vset.pattern.permute.xlu0 0
        %720 = vperm.xlu0 %719, %v710
        %v721 = vpop.permute.xlu0 %720
        %v723 = vlaneseq
        %v724 = vshrl.u32 %v723, 7
        %v725 = vsub.s32 0, %v724
        %v726 = vrot.slane %v721, %v725
        %728 = vset.pattern.permute.xlu0 0
        %729 = vperm.xlu0 %728, %v716
        %v730 = vpop.permute.xlu0 %729
        %v732 = vlaneseq
        %v733 = vshrl.u32 %v732, 7
        %v734 = vsub.s32 0, %v733
        %v735 = vrot.slane %v730, %v734
        %v736 = vsel %vm717, %v726, %v735
        %vm737 = vcmask 8192
        %738 = vst.msk [vmem:[%s326] sm:$0x1] %vm737, %v736
      $region56: #{retina_loss.1} parent=39 // pred_fallthru
        _
      %p739 = pnand %p329, %p675
      %p740 = pneg %p739
      // Predicated region
      $region57: #{retina_loss.1} parent=39 // pred_check
        _
      $region58: #{retina_loss.1} parent=39 // pred_check_branch
        %742 = sbr.rel (%p739) target = $region60
      $region59: #{retina_loss.1} parent=39 // pred_region
        %vm743 = vcmp.eq.s32.totalorder %v701, 0
        %v744 = vld [vmem:[#allocation5] sm:$0x1]
        %746 = vset.pattern.permute.xlu0 0
        %747 = vperm.xlu0 %746, %v744
        %v748 = vpop.permute.xlu0 %747
        %v750 = vlaneseq
        %v751 = vshrl.u32 %v750, 7
        %v752 = vsub.s32 0, %v751
        %v753 = vrot.slane %v748, %v752
        %v754 = vsel %vm743, %v753, 0.0
        %vm755 = vcmask 8192
        %756 = vst.msk [vmem:[%s326] sm:$0x1] %vm755, %v754
      $region60: #{retina_loss.1} parent=39 // pred_fallthru
        _
      %p757 = scmp.lt.s32.totalorder %s27, 2
      %s758 = scalar_select %p757, %s27, 2
      %s759 = scalar_lea.vmem %s6, %s758
      // Predicated region
      $region61: #{retina_loss.1} parent=39 // pred_check
        %p760 = pneg %p187
      $region62: #{retina_loss.1} parent=39 // pred_check_branch
        %762 = sbr.rel (%p760) target = $region64
      $region63: #{retina_loss.1} parent=39 // pred_region
        _
      $region64: #{retina_loss.1} parent=39 // pred_fallthru
        _
    $region40: #{retina_loss.1} parent=5 // pred_fallthru
      _
    %p763 = scmp.le.s32.totalorder 2, %s18
    // Predicated region
    $region65: #{retina_loss.1} parent=5 // pred_check
      %p764 = pneg %p763
    $region66: #{retina_loss.1} parent=5 // pred_check_branch
      %766 = sbr.rel (%p764) target = $region68
    $region67: #{retina_loss.1} parent=5 // pred_region
      %s767 = ssub.s32 %s18, 2
      // Predicated region
      $region69: #{retina_loss.1} parent=67 // pred_check
        %p768 = pneg %p193
      $region70: #{retina_loss.1} parent=67 // pred_check_branch
        %770 = sbr.rel (%p768) target = $region72
      $region71: #{retina_loss.1} parent=67 // pred_region
        %p771 = scmp.lt.s32.totalorder %s29, 2
        %s772 = scalar_select %p771, %s29, 2
        %s773 = scalar_lea.vmem %s6, %s772
      $region72: #{retina_loss.1} parent=67 // pred_fallthru
        _
    $region68: #{retina_loss.1} parent=5 // pred_fallthru
      _
  $region6: #{retina_loss.1} parent=0 // loop_footer
    %s22 = sadd.s32 1, %s18
  $region7: #{retina_loss.1} parent=0 // loop_footer_branch
    %17 = sbr.rel target = $region3
  $region8: #{retina_loss.1} parent=0 // loop_exit
    _

</llo_original>
